<compile_context>
chip_gen: v7x
topology: tpu7x:2x2x1
jax: 0.10.0
libtpu: 0.0.40
codegen_flags: <defaults>
</compile_context>

<pallas_src>
import jax
import jax.numpy as jnp
from jax.experimental import pallas as pl
from jax.experimental.pallas import tpu as pltpu


def _softmax_body_kernel(T: float, A: int):
    def kernel(x_ref, u_ref, tri_ref, act_ref):
        x = x_ref[...]                                    # (A, TB) f32, lane-dense

        # --- stable exponent with the temperature folded in (trace-time) -----
        if T >= 0:
            # max commutes with a non-negative scale: one fewer (A, TB) multiply
            z = x - jnp.max(x, axis=0, keepdims=True)     # cheap sublane max
            if T != 1.0:
                z = z * T
        else:
            xs = x * T
            z = xs - jnp.max(xs, axis=0, keepdims=True)
        e = jnp.exp(z)                                    # unnormalized probs

        # --- inclusive CDF along the action (sublane) axis via the MXU --------
        # cdf[j, i] = sum_{k <= j} e[k, i]; tri is lower-triangular ones (hoisted).
        cdf = jnp.dot(tri_ref[...], e, preferred_element_type=jnp.float32)

        # --- inverse-CDF multinomial sample, unnormalized comparison ----------
        # The last CDF row IS sum(e): no extra reduction, and the threshold is
        # numerically consistent with the matmul-computed CDF.
        thresh = u_ref[...] * cdf[A - 1:A, :]             # (1, TB)
        idx = jnp.sum((cdf < thresh).astype(jnp.int32), axis=0, keepdims=True)
        act_ref[...] = jnp.minimum(idx, A - 1)            # clamp: safety net only

    return kernel


def softmax_body(outputs: jax.Array, u: jax.Array, T: float, *,
                 block_rows: int = 4096) -> jax.Array:
    """outputs: (B, A) float logits ("Q-values"); u: (B, 1) uniforms in [0, 1).

    Returns (B, 1) int32 actions sampled from multinomial(softmax(outputs * T)).
    """
    B, A = outputs.shape

    # Lane-dense operands: batch on lanes, actions on sublanes.
    xT = outputs.astype(jnp.float32).T          # (A, B): one upstream transpose
    uT = u.astype(jnp.float32).reshape(1, B)    # (1, B): free, lane-dense

    # Hoisted constant: lower-triangular (incl. diag) so tri @ e gives the
    # inclusive CDF along the action (sublane) axis.
    tri = (jnp.arange(A, dtype=jnp.int32)[:, None]
           >= jnp.arange(A, dtype=jnp.int32)[None, :]).astype(jnp.float32)

    # Tile selection: one tile when the batch fits (v5e/v6e: amortize per-step
    # overhead); otherwise an even number of 128-lane-aligned tiles so the
    # ("parallel",) axis balances across v7x's two TensorCores.  The last tile
    # may be ragged -- no padding pass.
    if B <= block_rows:
        tb = B
    else:
        n_tiles = pl.cdiv(B, block_rows)
        if n_tiles % 2:
            n_tiles += 1                         # best-effort even grid (v7x)
        tb = pl.cdiv(B, n_tiles * 128) * 128     # lane-aligned tile width
    grid = pl.cdiv(B, tb)

    acts = pl.pallas_call(
        _softmax_body_kernel(float(T), A),
        out_shape=jax.ShapeDtypeStruct((1, B), jnp.int32),
        grid=(grid,),
        in_specs=[
            pl.BlockSpec((A, tb), lambda i: (0, i)),   # transposed logits tile
            pl.BlockSpec((1, tb), lambda i: (0, i)),   # per-row uniforms
            pl.BlockSpec((A, A), lambda i: (0, 0)),    # hoisted CDF constant
        ],
        out_specs=pl.BlockSpec((1, tb), lambda i: (0, i)),  # lane-dense actions
        compiler_params=pltpu.CompilerParams(
            dimension_semantics=("parallel",)),
    )(xT, uT, tri)

    return acts.reshape(B, 1)


def softmax_body_ref(outputs: jax.Array, u: jax.Array, T: float) -> jax.Array:
    """Pure-JAX reference (normalized softmax + cumsum inverse-CDF)."""
    probs = jax.nn.softmax(outputs.astype(jnp.float32) * T, axis=-1)
    cdf = jnp.cumsum(probs, axis=-1)
    idx = jnp.sum((cdf < u).astype(jnp.int32), axis=-1, keepdims=True)
    return jnp.minimum(idx, outputs.shape[-1] - 1)


if __name__ == "__main__":
    A = 32                        # number of actions

    key = jax.random.PRNGKey(0)
    k_x, k_u, k_x2, k_u2 = jax.random.split(key, 4)

    # --- small case: single tile, T == 1 (multiply skipped at trace time) ----
    B, T = 8, 1.0
    outputs = jax.random.normal(k_x, (B, A), dtype=jnp.float32)   # "Q-values"
    u = jax.random.uniform(k_u, (B, 1), dtype=jnp.float32)        # sampling uniforms
    actions = jax.block_until_ready(softmax_body(outputs, u, T))
    expected = softmax_body_ref(outputs, u, T)
    assert actions.shape == (B, 1) and actions.dtype == jnp.int32
    # off-by-one tolerated only at exact CDF/u tie boundaries (fp rounding).
    assert bool(jnp.all(jnp.abs(actions - expected) <= 1)), (actions, expected)

    # --- multi-tile case: ragged last block (no pad) + T != 1 path -----------
    B2, T2 = 300, 0.5
    outputs2 = jax.random.normal(k_x2, (B2, A), dtype=jnp.float32)
    u2 = jax.random.uniform(k_u2, (B2, 1), dtype=jnp.float32)
    actions2 = jax.block_until_ready(softmax_body(outputs2, u2, T2, block_rows=128))
    expected2 = softmax_body_ref(outputs2, u2, T2)
    assert actions2.shape == (B2, 1) and actions2.dtype == jnp.int32
    assert bool(jnp.all(jnp.abs(actions2 - expected2) <= 1))

    print("KERNEL_OK")
</pallas_src>

<mosaic_0001>
module attributes {stable_mosaic.version = 11 : i64} {
  func.func @kernel(%arg0: i32, %arg1: memref<32x8xf32, #tpu.memory_space<vmem>>, %arg2: memref<1x8xf32, #tpu.memory_space<vmem>>, %arg3: memref<32x32xf32, #tpu.memory_space<vmem>>, %arg4: memref<1x8xi32, #tpu.memory_space<vmem>>) attributes {dimension_semantics = [#tpu.dimension_semantics<parallel>], iteration_bounds = array<i64: 1>, scalar_prefetch = 0 : i64, scratch_operands = 0 : i64, tpu.core_type = #tpu.core_type<tc>, window_params = [{transform_indices = @transform_0, window_bounds = array<i64: 32, 8>}, {transform_indices = @transform_1, window_bounds = array<i64: 1, 8>}, {pipeline_mode = #tpu.pipeline_mode<synchronous>, transform_indices = @transform_2, window_bounds = array<i64: 32, 32>}, {transform_indices = @transform_3, window_bounds = array<i64: 1, 8>}]} {
    %c0 = arith.constant 0 : index
    %c0_0 = arith.constant 0 : index
    %0 = vector.load %arg1[%c0, %c0_0] : memref<32x8xf32, #tpu.memory_space<vmem>>, vector<32x8xf32>
    %cst = arith.constant dense<0xFF800000> : vector<8xf32>
    %1 = vector.multi_reduction <maximumf>, %0, %cst [0] : vector<32x8xf32> to vector<8xf32>
    %2 = vector.shape_cast %1 : vector<8xf32> to vector<1x8xf32>
    %3 = vector.broadcast %2 : vector<1x8xf32> to vector<32x8xf32>
    %4 = arith.subf %0, %3 : vector<32x8xf32>
    %5 = math.exp %4 : vector<32x8xf32>
    %c0_1 = arith.constant 0 : index
    %c0_2 = arith.constant 0 : index
    %6 = vector.load %arg3[%c0_1, %c0_2] : memref<32x32xf32, #tpu.memory_space<vmem>>, vector<32x32xf32>
    %cst_3 = arith.constant dense<0.000000e+00> : vector<32x8xf32>
    %7 = tpu.matmul %6, %5, %cst_3 {dimension_numbers = #tpu.dot_dimension_numbers<[1], [0], [0], [1], [0, 0, 1, 1], [], []>} : vector<32x32xf32>, vector<32x8xf32>, vector<32x8xf32> -> vector<32x8xf32>
    %c0_4 = arith.constant 0 : index
    %c0_5 = arith.constant 0 : index
    %8 = vector.load %arg2[%c0_4, %c0_5] : memref<1x8xf32, #tpu.memory_space<vmem>>, vector<1x8xf32>
    %9 = vector.extract_strided_slice %7 {offsets = [31, 0], sizes = [1, 8], strides = [1, 1]} : vector<32x8xf32> to vector<1x8xf32>
    %10 = arith.mulf %8, %9 : vector<1x8xf32>
    %11 = vector.broadcast %10 : vector<1x8xf32> to vector<32x8xf32>
    %12 = arith.cmpf olt, %7, %11 : vector<32x8xf32>
    %13 = arith.extui %12 : vector<32x8xi1> to vector<32x8xi32>
    %cst_6 = arith.constant dense<0> : vector<8xi32>
    %14 = vector.multi_reduction <add>, %13, %cst_6 [0] : vector<32x8xi32> to vector<8xi32>
    %15 = vector.shape_cast %14 : vector<8xi32> to vector<1x8xi32>
    %c31_i32 = arith.constant 31 : i32
    %16 = vector.broadcast %c31_i32 : i32 to vector<1x8xi32>
    %17 = arith.minsi %15, %16 : vector<1x8xi32>
    %c0_7 = arith.constant 0 : index
    %c0_8 = arith.constant 0 : index
    %18 = vector.load %arg4[%c0_7, %c0_8] : memref<1x8xi32, #tpu.memory_space<vmem>>, vector<1x8xi32>
    tpu.vector_store %arg4[%c0_7, %c0_8], %17 {strides = array<i32>} : memref<1x8xi32, #tpu.memory_space<vmem>>, vector<1x8xi32>,
    return
  }
  func.func @transform_0(%arg0: i32) -> (i32, i32) {
    %c0_i32 = arith.constant 0 : i32
    %c0_i32_0 = arith.constant 0 : i32
    return %c0_i32, %arg0 : i32, i32
  }
  func.func @transform_1(%arg0: i32) -> (i32, i32) {
    %c0_i32 = arith.constant 0 : i32
    %c0_i32_0 = arith.constant 0 : i32
    return %c0_i32, %arg0 : i32, i32
  }
  func.func @transform_2(%arg0: i32) -> (i32, i32) {
    %c0_i32 = arith.constant 0 : i32
    %c0_i32_0 = arith.constant 0 : i32
    %c0_i32_1 = arith.constant 0 : i32
    return %c0_i32, %c0_i32_0 : i32, i32
  }
  func.func @transform_3(%arg0: i32) -> (i32, i32) {
    %c0_i32 = arith.constant 0 : i32
    %c0_i32_0 = arith.constant 0 : i32
    return %c0_i32, %arg0 : i32, i32
  }
}

</mosaic_0001>

<llo_original>
// kernel: tpu_custom_call.1
$region0: #{tpu_custom_call.1}
  #allocation0 [shape = 'u32[]', space=smem, size = 0x4, offset = 0x4, fixed_abs, tag = 'smem constant byte address 0x4 - core index']
  #allocation1 [shape = 'u32[144,128]{1,0:T(1,128)}', space=vmem, size = 0x12000, scoped, tag = 'internal scratch']
  %s0 = inlined_call_operand.vmem [shape: f32[32,8], index: 0, kind: input, shape index: {}]
  %s1 = inlined_call_operand.vmem [shape: f32[1,8], index: 1, kind: input, shape index: {}]
  %s2 = inlined_call_operand.vmem [shape: f32[32,32], index: 2, kind: input, shape index: {}]
  %s3 = inlined_call_operand.hbm [shape: s32[1,8], index: 3, kind: output, shape index: {}]
  %s4 = sld [smem:[#allocation0]]
  $region22: #{tpu_custom_call.1} parent=0
    _
  %s6 = ssub.s32 1, %s4
  %s7 = scalar_select 0, %s6, %s4
  $region1: #{tpu_custom_call.1} parent=0
    #allocation2 [shape = 'u8[512]{0}', space=vmem, size = 0x400, scoped, tag = 'output window, operand 0, single buffered']
    #allocation3 [shape = 's32[1]{0}', space=sflag, size = 0x4, scoped, tag = 'scoped memory for tpu_custom_call.1']
    %8 = vsyncpa [#allocation3], 0
    // Predicated region
    $region2: #{tpu_custom_call.1} parent=1 // pred_check
      _
    $region3: #{tpu_custom_call.1} parent=1 // pred_check_branch
      %10 = sbr.rel (0) target = $region5
    $region4: #{tpu_custom_call.1} parent=1 // pred_region
      _
    $region5: #{tpu_custom_call.1} parent=1 // pred_fallthru
      _
    // Predicated region
    $region6: #{tpu_custom_call.1} parent=1 // pred_check
      _
    $region7: #{tpu_custom_call.1} parent=1 // pred_check_branch
      %12 = sbr.rel (0) target = $region9
    $region8: #{tpu_custom_call.1} parent=1 // pred_region
      _
    $region9: #{tpu_custom_call.1} parent=1 // pred_fallthru
      _
    // Predicated region
    $region10: #{tpu_custom_call.1} parent=1 // pred_check
      _
    $region11: #{tpu_custom_call.1} parent=1 // pred_check_branch
      %14 = sbr.rel (0) target = $region13
    $region12: #{tpu_custom_call.1} parent=1 // pred_region
      _
    $region13: #{tpu_custom_call.1} parent=1 // pred_fallthru
      _
    %v15 = vld [vmem:[%s0] sm:$0xff]
    %v16 = vld [vmem:[%s0 + $0x8] sm:$0xff]
    %v17 = vld [vmem:[%s0 + $0x10] sm:$0xff]
    %v18 = vld [vmem:[%s0 + $0x18] sm:$0xff]
    %vm19 = vcmask 64512
    %v20 = vsel %vm19, %v15, -inf
    %v21 = vsel %vm19, %v16, -inf
    %v22 = vsel %vm19, %v17, -inf
    %v23 = vsel %vm19, %v18, -inf
    %v24 = vmax.f32 %v20, %v21
    %v25 = vmax.f32 %v22, %v23
    %v26 = vmax.f32 %v24, %v25
    %v27 = vrot.slane %v26, 4
    %v28 = vmax.f32 %v26, %v27
    %v29 = vrot.slane %v28, 2
    %v30 = vmax.f32 %v28, %v29
    %v31 = vrot.slane %v30, 1
    %v32 = vmax.f32 %v30, %v31
    %v33 = vsub.f32 %v15, %v32
    %v34 = vsub.f32 %v16, %v32
    %v35 = vsub.f32 %v17, %v32
    %v36 = vsub.f32 %v18, %v32
    %v37 = vmul.f32 %v33, 1.442695
    %v38 = vpow.pop %v37
    %v39 = vmul.f32 %v34, 1.442695
    %v40 = vpow.pop %v39
    %v41 = vmul.f32 %v35, 1.442695
    %v42 = vpow.pop %v41
    %v43 = vmul.f32 %v36, 1.442695
    %v44 = vpow.pop %v43
    %v45 = vld [vmem:[%s2] sm:$0xff]
    %v46 = vld [vmem:[%s2 + $0x8] sm:$0xff]
    %v47 = vld [vmem:[%s2 + $0x10] sm:$0xff]
    %v48 = vld [vmem:[%s2 + $0x18] sm:$0xff]
    %vm49 = vcmask 261120
    %v51 = vsel %vm49, %v45, 0
    %v54 = vsel %vm49, %v46, 0
    %v57 = vsel %vm49, %v47, 0
    %v60 = vsel %vm49, %v48, 0
    %62 = vmatprep.subr.mxu0 0.0
    %63 = vmatpush1.msra.mxu0 %v38
    %64 = vmatprep.subr.mxu0 0.0
    %65 = vmatpush1.msra.mxu0 %v40
    %66 = vmatprep.subr.mxu0 0.0
    %67 = vmatpush1.msra.mxu0 %v42
    %68 = vmatprep.subr.mxu0 0.0
    %69 = vmatpush1.msra.mxu0 %v44
    %70 = vmatprep.subr.mxu0 0.0
    %71 = vmatpush1.msra.mxu0 0.0
    %72 = vmatprep.subr.mxu0 0.0
    %73 = vmatpush1.msra.mxu0 0.0
    %74 = vmatprep.subr.mxu0 0.0
    %75 = vmatpush1.msra.mxu0 0.0
    %76 = vmatprep.subr.mxu0 0.0
    %77 = vmatpush1.msra.mxu0 0.0
    %78 = vmatprep.subr.mxu0 0.0
    %79 = vmatpush1.msra.mxu0 0.0
    %80 = vmatprep.subr.mxu0 0.0
    %81 = vmatpush1.msra.mxu0 0.0
    %82 = vmatprep.subr.mxu0 0.0
    %83 = vmatpush1.msra.mxu0 0.0
    %84 = vmatprep.subr.mxu0 0.0
    %85 = vmatpush1.msra.mxu0 0.0
    %86 = vmatprep.subr.mxu0 0.0
    %87 = vmatpush1.msra.mxu0 0.0
    %88 = vmatprep.subr.mxu0 0.0
    %89 = vmatpush1.msra.mxu0 0.0
    %90 = vmatprep.subr.mxu0 0.0
    %91 = vmatpush1.msra.mxu0 0.0
    %92 = vmatprep.subr.mxu0 0.0
    %93 = vmatpush1.msra.mxu0 0.0
    %94 = vmatprep.subr.mxu0 0.0
    %95 = vmatpush1.msra.mxu0 0.0
    %96 = vmatprep.subr.mxu0 0.0
    %97 = vmatpush1.msra.mxu0 0.0
    %98 = vmatprep.subr.mxu0 0.0
    %99 = vmatpush1.msra.mxu0 0.0
    %100 = vmatprep.subr.mxu0 0.0
    %101 = vmatpush1.msra.mxu0 0.0
    %102 = vmatprep.subr.mxu0 0.0
    %103 = vmatpush1.msra.mxu0 0.0
    %104 = vmatprep.subr.mxu0 0.0
    %105 = vmatpush1.msra.mxu0 0.0
    %106 = vmatprep.subr.mxu0 0.0
    %107 = vmatpush1.msra.mxu0 0.0
    %108 = vmatprep.subr.mxu0 0.0
    %109 = vmatpush1.msra.mxu0 0.0
    %110 = vmatprep.subr.mxu0 0.0
    %111 = vmatpush1.msra.mxu0 0.0
    %112 = vmatprep.subr.mxu0 0.0
    %113 = vmatpush1.msra.mxu0 0.0
    %114 = vmatprep.subr.mxu0 0.0
    %115 = vmatpush1.msra.mxu0 0.0
    %116 = vmatprep.subr.mxu0 0.0
    %117 = vmatpush1.msra.mxu0 0.0
    %118 = vmatprep.subr.mxu0 0.0
    %119 = vmatpush1.msra.mxu0 0.0
    %120 = vmatprep.subr.mxu0 0.0
    %121 = vmatpush1.msra.mxu0 0.0
    %122 = vmatprep.subr.mxu0 0.0
    %123 = vmatpush1.msra.mxu0 0.0
    %124 = vmatprep.subr.mxu0 0.0
    %125 = vmatpush1.msra.mxu0 0.0
    %126 = vmatprep.mubr.f32.mxu0 0.0
    %127 = vmatmul.mubr.f32.gmra.mrb[0].mxu0 %v51
    %v128 = vpop.f32.mrb[0].mxu0
    %v129 = vadd.f32 0.0, %v128
    %v130 = vpop.f32.mrb[0].mxu0
    %131 = vmatprep.mubr.f32.mxu0 0.0
    %132 = vmatmul.mubr.f32.gmra.mrb[0].mxu0 %v54
    %v133 = vpop.f32.mrb[0].mxu0
    %v134 = vadd.f32 0.0, %v133
    %v135 = vpop.f32.mrb[0].mxu0
    %136 = vmatprep.mubr.f32.mxu0 0.0
    %137 = vmatmul.mubr.f32.gmra.mrb[0].mxu0 %v57
    %v138 = vpop.f32.mrb[0].mxu0
    %v139 = vadd.f32 0.0, %v138
    %v140 = vpop.f32.mrb[0].mxu0
    %141 = vmatprep.mubr.f32.mxu0 0.0
    %142 = vmatmul.mubr.f32.gmra.mrb[0].mxu0 %v60
    %v143 = vpop.f32.mrb[0].mxu0
    %v144 = vadd.f32 0.0, %v143
    %v145 = vpop.f32.mrb[0].mxu0
    %146 = vdwg.mxu0
    %v147 = vld [vmem:[%s1] sm:$0x1]
    %v149 = vcombine.high %v144, %v144
    %v151 = vunpack.c.l.s4 1966171168
    %v152 = vunpack.c.0.s8 %v151
    %v153 = vlaneseq
    %v154 = vshrl.u32 %v153, 7
    %v155 = vsub.s32 %v152, %v154
    %v156 = vrot.slane %v149, %v155
    %v157 = vcombine.high %v156, %v156
    %v159 = vunpack.c.l.s4 1966171168
    %v160 = vunpack.c.0.s8 %v159
    %v161 = vlaneseq
    %v162 = vshrl.u32 %v161, 7
    %v163 = vsub.s32 %v160, %v162
    %v164 = vrot.slane %v157, %v163
    %v165 = vcombine.high %v164, %v164
    %v167 = vmul.f32 %v147, %v165
    %v169 = vlaneseq
    %v170 = vshrl.u32 %v169, 7
    %v171 = vsub.s32 0, %v170
    %v172 = vrot.slane %v167, %v171
    %vm174 = vcmp.lt.f32.partialorder %v129, %v172
    %vm175 = vcmp.lt.f32.partialorder %v134, %v172
    %vm176 = vcmp.lt.f32.partialorder %v139, %v172
    %vm177 = vcmp.lt.f32.partialorder %v144, %v172
    %v178 = vsel %vm174, 1, 0
    %v179 = vsel %vm175, 1, 0
    %v180 = vsel %vm176, 1, 0
    %v181 = vsel %vm177, 1, 0
    %v182 = vsel %vm19, %v178, 0
    %v183 = vsel %vm19, %v179, 0
    %v184 = vsel %vm19, %v180, 0
    %v185 = vsel %vm19, %v181, 0
    %v186 = vadd.s32 %v182, %v183
    %v187 = vadd.s32 %v184, %v185
    %v188 = vadd.s32 %v186, %v187
    %v189 = vrot.slane %v188, 4
    %v190 = vadd.s32 %v188, %v189
    %v191 = vrot.slane %v190, 2
    %v192 = vadd.s32 %v190, %v191
    %v193 = vrot.slane %v192, 1
    %v194 = vadd.s32 %v192, %v193
    %vm195 = vcmp.lt.s32.totalorder %v194, 31
    %v196 = vsel %vm195, %v194, 31
    %vm197 = vcmask 57344
    %198 = vst.msk [vmem:[#allocation2] sm:$0x1] %vm197, %v196
    // Predicated region
    $region14: #{tpu_custom_call.1} parent=1 // pred_check
      _
    $region15: #{tpu_custom_call.1} parent=1 // pred_check_branch
      %200 = sbr.rel (0) target = $region17
    $region16: #{tpu_custom_call.1} parent=1 // pred_region
      %s202 = ssub.s32 16, 16
      %203 = vsyncadd [#allocation3], %s202
      %s205 = sshll.u32 [#allocation2], 4
      %s206 = int_to_ptr.vmem [resolvable:$true] %s205
      %208 = dma.vmem_to_hbm [thread:$0]  %s206, 16, %s3, [#allocation3]
    $region17: #{tpu_custom_call.1} parent=1 // pred_fallthru
      _
    // Predicated region
    $region18: #{tpu_custom_call.1} parent=1 // pred_check
      _
    $region19: #{tpu_custom_call.1} parent=1 // pred_check_branch
      %210 = sbr.rel (0) target = $region21
    $region20: #{tpu_custom_call.1} parent=1 // pred_region
      %211 = dma.done [#allocation3], 16
    $region21: #{tpu_custom_call.1} parent=1 // pred_fallthru
      _
    %212 = vsyncpa [#allocation3], 1

</llo_original>
